<compile_context>
chip_gen: v6e
topology: v6e:2x2x1
jax: 0.10.0
libtpu: 0.0.40
codegen_flags: <defaults>
</compile_context>

<pallas_src>
import jax
import jax.numpy as jnp
from jax.experimental import pallas as pl
from jax.experimental.pallas import tpu as pltpu

# ----------------------------- model dims (small) ---------------------------
B = 2                 # batch
C_BACKBONE = 4        # backbone output channels
IMG_H = IMG_W = 16    # feature-map spatial size
HIDDEN = 32           # transformer.d_model
GN_GROUPS = 32        # nn.GroupNorm(32, hidden_dim) -> group size 1 here
BERT_HIDDEN = 48      # bert.config.hidden_size (synthetic)
L_TEXT = 8            # tokenized caption length
NUM_QUERIES = 16
NUM_DEC_LAYERS = 3    # transformer.num_decoder_layers
MAX_TEXT_LEN = 256    # self.max_text_len

F32 = jnp.float32


# ------------------- kernel 1: input_proj (conv1x1 + GroupNorm) -------------
def _conv1x1_gn_kernel(x_ref, wt_ref, b_ref, g_ref, beta_ref, o_ref):
    # x_ref: (1, Cin, HW)   wt_ref: (Cout, Cin)   o_ref: (1, Cout, HW)
    # Channels on sublanes, HW on lanes -> dense full-width stores; GroupNorm
    # reduction is a lane-axis (XLU) reduce next to the VPU work.
    x = x_ref[0]                                                    # (Cin, HW)
    y = jnp.dot(wt_ref[...], x, preferred_element_type=jnp.float32) + b_ref[...]
    # GroupNorm(32, 32): num_groups == num_channels -> per-channel stats over
    # the spatial axis (exactly matches PyTorch for this configuration).
    # TODO(synk): real GroundingDINO uses GN(32, 256) (group size 8); stats
    # would also reduce over the channel group when HIDDEN is scaled up.
    mean = jnp.mean(y, axis=1, keepdims=True)
    var = jnp.mean((y - mean) ** 2, axis=1, keepdims=True)
    yn = (y - mean) * jax.lax.rsqrt(var + 1e-5)
    o_ref[0] = yn * g_ref[...] + beta_ref[...]


def input_proj(x_nchw, wt, b, gamma, beta):
    """srcs[0] = GroupNorm(Conv1x1(features[0])).  Stays NCHW end-to-end:
    the kernel reads (B, Cin, H*W) and writes (B, Cout, H*W) -> no transposes."""
    bb, c, hh, ww = x_nchw.shape
    hw = hh * ww
    cout = wt.shape[0]
    x = x_nchw.reshape(bb, c, hw)                 # free reshape, no transpose
    out = pl.pallas_call(
        _conv1x1_gn_kernel,
        grid=(bb,),
        in_specs=[
            pl.BlockSpec((1, c, hw), lambda i: (i, 0, 0)),
            pl.BlockSpec((cout, c), lambda i: (0, 0)),
            pl.BlockSpec((cout, 1), lambda i: (0, 0)),
            pl.BlockSpec((cout, 1), lambda i: (0, 0)),
            pl.BlockSpec((cout, 1), lambda i: (0, 0)),
        ],
        out_specs=pl.BlockSpec((1, cout, hw), lambda i: (i, 0, 0)),
        out_shape=jax.ShapeDtypeStruct((bb, cout, hw), F32),
        compiler_params=pltpu.CompilerParams(dimension_semantics=("parallel",)),
    )(x, wt, b, gamma, beta)
    return out.reshape(bb, cout, hh, ww)          # already NCHW


# --------- kernel 2: fused feat_map + class head + bbox head (no grid) ------
def _heads_kernel(bert_ref, mask_ref, hs_ref, refpt_ref,
                  wfm_ref, bfm_ref, w1_ref, b1_ref, w2_ref, b2_ref,
                  w3_ref, b3_ref,
                  enc_ref, cls_ref, box_ref):
    L, Bb, Q, H = hs_ref.shape
    Lt = bert_ref.shape[1]
    f32 = jnp.float32
    neg_inf = jnp.float32(-jnp.inf)

    hs_all = hs_ref[...]                              # (L,B,Q,H), loaded once

    # ---- shared bbox_embed MLP + inverse_sigmoid + sigmoid -------------------
    # All layers/batches flattened into the matmul M dimension: one pass.
    x = hs_all.reshape(L * Bb * Q, H)
    # TODO(synk): at real dims (HIDDEN=256, Q=900) cast matmul operands to bf16
    # (keep f32 accumulation) on v6e/v7x, and retile for v7x's 64 MiB VMEM.
    h1 = jnp.maximum(
        jnp.dot(x, w1_ref[...], preferred_element_type=f32) + b1_ref[...], 0.0)
    h2 = jnp.maximum(
        jnp.dot(h1, w2_ref[...], preferred_element_type=f32) + b2_ref[...], 0.0)
    delta = jnp.dot(h2, w3_ref[...], preferred_element_type=f32) + b3_ref[...]
    r = jnp.clip(refpt_ref[...].reshape(L * Bb * Q, 4), 0.0, 1.0)
    eps = 1e-3
    inv_sig = jnp.log(jnp.maximum(r, eps)) - jnp.log(jnp.maximum(1.0 - r, eps))
    u = delta + inv_sig
    box = pl.reciprocal(1.0 + jnp.exp(-u), approx=True)    # sigmoid via EUP
    box_ref[...] = box.reshape(L, Bb, Q, 4)

    # ---- ContrastiveEmbed class head fused with feat_map ---------------------
    # Initialise the whole logits slab to -inf with one dense store, then only
    # compute / write the real Lt text columns (no 256-wide padded matmul).
    cls_ref[...] = jnp.full(cls_ref.shape, neg_inf, f32)
    for b in range(Bb):                                   # B small & static
        # encoded_text = feat_map(bert_last_hidden)  -- stays in VMEM
        enc = (jnp.dot(bert_ref[b], wfm_ref[...], preferred_element_type=f32)
               + bfm_ref[...])                            # (Lt, H)
        enc_ref[b] = enc
        xb = hs_all[:, b].reshape(L * Q, H)               # (L*Q, H)
        logits = jax.lax.dot_general(                     # hs @ enc^T
            xb, enc, (((1,), (1,)), ((), ())), preferred_element_type=f32)
        logits = jnp.where(mask_ref[b] > 0.5, logits, neg_inf)
        cls_ref[:, b, :, :Lt] = logits.reshape(L, Q, Lt)


def fused_heads(bert_last_hidden, text_token_mask, hs, reference, params):
    """One pallas_call, no grid: returns (encoded_text, outputs_class,
    outputs_coord) matching feat_map / ContrastiveEmbed / bbox_embed."""
    ll, bb, q, h = hs.shape
    lt = bert_last_hidden.shape[1]
    mask = text_token_mask.astype(F32)[:, None, :]        # (B, 1, Lt)
    return pl.pallas_call(
        _heads_kernel,
        out_shape=(
            jax.ShapeDtypeStruct((bb, lt, h), F32),               # encoded_text
            jax.ShapeDtypeStruct((ll, bb, q, MAX_TEXT_LEN), F32),  # class logits
            jax.ShapeDtypeStruct((ll, bb, q, 4), F32),             # boxes
        ),
    )(bert_last_hidden, mask, hs, reference,
      params["feat_map_w"], params["feat_map_b"],
      params["bbox_w1"], params["bbox_b1"],
      params["bbox_w2"], params["bbox_b2"],
      params["bbox_w3"], params["bbox_b3"])


# ------------------------------- parameters ---------------------------------
def _xavier_uniform(key, shape):
    fan_in, fan_out = shape[0], shape[1]   # xavier bound is symmetric in fans
    bound = (6.0 / (fan_in + fan_out)) ** 0.5
    return jax.random.uniform(key, shape, F32, -bound, bound)


def init_params(key):
    ks = jax.random.split(key, 8)
    params = {}
    # feat_map: Linear(bert_hidden, hidden), bias init 0, weight xavier
    params["feat_map_w"] = _xavier_uniform(ks[0], (BERT_HIDDEN, HIDDEN))
    params["feat_map_b"] = jnp.zeros((1, HIDDEN), F32)
    # input_proj[0]: Conv2d(C_backbone, hidden, k=1) xavier, bias 0; GN affine.
    # Weight stored pre-transposed as (Cout, Cin) for the channels-on-sublanes
    # kernel layout; per-channel vectors as (Cout, 1) columns.
    params["proj_wt"] = _xavier_uniform(ks[1], (HIDDEN, C_BACKBONE))
    params["proj_b"] = jnp.zeros((HIDDEN, 1), F32)
    params["gn_gamma"] = jnp.ones((HIDDEN, 1), F32)
    params["gn_beta"] = jnp.zeros((HIDDEN, 1), F32)
    # shared bbox_embed MLP(hidden, hidden, 4, 3); last layer zero-init
    params["bbox_w1"] = _xavier_uniform(ks[2], (HIDDEN, HIDDEN))
    params["bbox_b1"] = jnp.zeros((1, HIDDEN), F32)
    params["bbox_w2"] = _xavier_uniform(ks[3], (HIDDEN, HIDDEN))
    params["bbox_b2"] = jnp.zeros((1, HIDDEN), F32)
    params["bbox_w3"] = jnp.zeros((HIDDEN, 4), F32)     # nn.init.constant_(.., 0)
    params["bbox_b3"] = jnp.zeros((1, 4), F32)          # nn.init.constant_(.., 0)
    return params


# -------------------------------- forward -----------------------------------
def grounding_dino_forward(params, bert_last_hidden, text_token_mask,
                           backbone_feature, hs, reference):
    """Reproduces the in-module compute of GroundingDINO.forward.

    bert_last_hidden : (B, L_TEXT, BERT_HIDDEN)  -- black-box BERT output
    text_token_mask  : (B, L_TEXT) bool
    backbone_feature : (B, C_BACKBONE, IMG_H, IMG_W) NCHW -- black-box backbone
    hs               : (L_dec, B, Q, HIDDEN)      -- black-box transformer out
    reference        : (L_dec+1, B, Q, 4) sigmoid-space refs from transformer
    """
    # vision branch: srcs = [ self.input_proj[0](features[0].tensors) ]
    srcs0 = input_proj(backbone_feature, params["proj_wt"], params["proj_b"],
                       params["gn_gamma"], params["gn_beta"])

    # text + head branch (fused): encoded_text = feat_map(bert last hidden),
    # per-decoder-layer class logits (shared ContrastiveEmbed) and boxes
    # (shared bbox_embed + inverse_sigmoid + sigmoid) in ONE pallas_call.
    encoded_text, outputs_class, outputs_coord = fused_heads(
        bert_last_hidden, text_token_mask, hs, reference[:NUM_DEC_LAYERS], params)

    # TODO(synk): backbone / BERT / tokenizer / deformable transformer are
    # external submodules; `hs` / `reference` stand in for transformer output,
    # and `srcs0` / `encoded_text` are what this module would feed it.
    out = {"pred_logits": outputs_class[-1],      # (B, Q, MAX_TEXT_LEN)
           "pred_boxes": outputs_coord[-1]}       # (B, Q, 4)
    return out, srcs0, encoded_text


# --------------------------------- main --------------------------------------
if __name__ == "__main__":
    key = jax.random.PRNGKey(0)
    kp, k1, k2, k3, k4 = jax.random.split(key, 5)

    params = init_params(kp)

    bert_last_hidden = jax.random.normal(k1, (B, L_TEXT, BERT_HIDDEN), F32)
    text_token_mask = jnp.array(
        [[True] * L_TEXT,
         [True] * (L_TEXT - 2) + [False, False]], dtype=bool)
    backbone_feature = jax.random.normal(k2, (B, C_BACKBONE, IMG_H, IMG_W), F32)
    hs = jax.random.normal(k3, (NUM_DEC_LAYERS, B, NUM_QUERIES, HIDDEN), F32)
    reference = jax.nn.sigmoid(
        jax.random.normal(k4, (NUM_DEC_LAYERS + 1, B, NUM_QUERIES, 4), F32))

    out, srcs0, encoded_text = grounding_dino_forward(
        params, bert_last_hidden, text_token_mask, backbone_feature, hs, reference)

    jax.block_until_ready(out["pred_logits"])
    jax.block_until_ready(out["pred_boxes"])
    jax.block_until_ready(srcs0)
    jax.block_until_ready(encoded_text)

    assert out["pred_logits"].shape == (B, NUM_QUERIES, MAX_TEXT_LEN)
    assert out["pred_boxes"].shape == (B, NUM_QUERIES, 4)
    assert srcs0.shape == (B, HIDDEN, IMG_H, IMG_W)
    assert encoded_text.shape == (B, L_TEXT, HIDDEN)
    assert bool(jnp.all(jnp.isfinite(out["pred_boxes"])))
    assert bool(jnp.all((out["pred_boxes"] >= 0.0) & (out["pred_boxes"] <= 1.0)))
    # padded text positions are -inf, valid (unmasked) positions are finite
    assert bool(jnp.all(jnp.isinf(out["pred_logits"][:, :, L_TEXT:])))
    assert bool(jnp.all(jnp.isfinite(out["pred_logits"][0, :, :L_TEXT])))

    print("KERNEL_OK")
</pallas_src>

<mosaic_0001>
module attributes {stable_mosaic.version = 11 : i64} {
  func.func @_conv1x1_gn_kernel(%arg0: i32, %arg1: memref<1x4x256xf32, #tpu.memory_space<vmem>>, %arg2: memref<32x4xf32, #tpu.memory_space<vmem>>, %arg3: memref<32x1xf32, #tpu.memory_space<vmem>>, %arg4: memref<32x1xf32, #tpu.memory_space<vmem>>, %arg5: memref<32x1xf32, #tpu.memory_space<vmem>>, %arg6: memref<1x32x256xf32, #tpu.memory_space<vmem>>) attributes {dimension_semantics = [#tpu.dimension_semantics<parallel>], iteration_bounds = array<i64: 2>, scalar_prefetch = 0 : i64, scratch_operands = 0 : i64, tpu.core_type = #tpu.core_type<tc>, window_params = [{transform_indices = @transform_0, window_bounds = array<i64: 1, 4, 256>}, {pipeline_mode = #tpu.pipeline_mode<synchronous>, transform_indices = @transform_1, window_bounds = array<i64: 32, 4>}, {pipeline_mode = #tpu.pipeline_mode<synchronous>, transform_indices = @transform_2, window_bounds = array<i64: 32, 1>}, {pipeline_mode = #tpu.pipeline_mode<synchronous>, transform_indices = @transform_3, window_bounds = array<i64: 32, 1>}, {pipeline_mode = #tpu.pipeline_mode<synchronous>, transform_indices = @transform_4, window_bounds = array<i64: 32, 1>}, {transform_indices = @transform_5, window_bounds = array<i64: 1, 32, 256>}]} {
    %c0 = arith.constant 0 : index
    %c0_0 = arith.constant 0 : index
    %c0_1 = arith.constant 0 : index
    %0 = vector.load %arg1[%c0, %c0_0, %c0_1] : memref<1x4x256xf32, #tpu.memory_space<vmem>>, vector<1x4x256xf32>
    %1 = vector.shape_cast %0 : vector<1x4x256xf32> to vector<4x256xf32>
    %c0_2 = arith.constant 0 : index
    %c0_3 = arith.constant 0 : index
    %2 = vector.load %arg2[%c0_2, %c0_3] : memref<32x4xf32, #tpu.memory_space<vmem>>, vector<32x4xf32>
    %cst = arith.constant dense<0.000000e+00> : vector<32x256xf32>
    %3 = tpu.matmul %2, %1, %cst {dimension_numbers = #tpu.dot_dimension_numbers<[1], [0], [0], [1], [0, 0, 1, 1], [], []>} : vector<32x4xf32>, vector<4x256xf32>, vector<32x256xf32> -> vector<32x256xf32>
    %c0_4 = arith.constant 0 : index
    %c0_5 = arith.constant 0 : index
    %4 = vector.load %arg3[%c0_4, %c0_5] : memref<32x1xf32, #tpu.memory_space<vmem>>, vector<32x1xf32>
    %5 = vector.broadcast %4 : vector<32x1xf32> to vector<32x256xf32>
    %6 = arith.addf %3, %5 : vector<32x256xf32>
    %cst_6 = arith.constant dense<0.000000e+00> : vector<32xf32>
    %7 = vector.multi_reduction <add>, %6, %cst_6 [1] : vector<32x256xf32> to vector<32xf32>
    %8 = vector.shape_cast %7 : vector<32xf32> to vector<32x1xf32>
    %cst_7 = arith.constant 2.560000e+02 : f32
    %9 = vector.broadcast %cst_7 : f32 to vector<32x1xf32>
    %10 = arith.divf %8, %9 : vector<32x1xf32>
    %11 = vector.broadcast %10 : vector<32x1xf32> to vector<32x256xf32>
    %12 = arith.subf %6, %11 : vector<32x256xf32>
    %13 = arith.mulf %12, %12 : vector<32x256xf32>
    %cst_8 = arith.constant dense<0.000000e+00> : vector<32xf32>
    %14 = vector.multi_reduction <add>, %13, %cst_8 [1] : vector<32x256xf32> to vector<32xf32>
    %15 = vector.shape_cast %14 : vector<32xf32> to vector<32x1xf32>
    %cst_9 = arith.constant 2.560000e+02 : f32
    %16 = vector.broadcast %cst_9 : f32 to vector<32x1xf32>
    %17 = arith.divf %15, %16 : vector<32x1xf32>
    %18 = vector.broadcast %10 : vector<32x1xf32> to vector<32x256xf32>
    %19 = arith.subf %6, %18 : vector<32x256xf32>
    %cst_10 = arith.constant 9.99999974E-6 : f32
    %20 = vector.broadcast %cst_10 : f32 to vector<32x1xf32>
    %21 = arith.addf %17, %20 : vector<32x1xf32>
    %22 = math.rsqrt %21 : vector<32x1xf32>
    %23 = vector.broadcast %22 : vector<32x1xf32> to vector<32x256xf32>
    %24 = arith.mulf %19, %23 : vector<32x256xf32>
    %c0_11 = arith.constant 0 : index
    %c0_12 = arith.constant 0 : index
    %25 = vector.load %arg4[%c0_11, %c0_12] : memref<32x1xf32, #tpu.memory_space<vmem>>, vector<32x1xf32>
    %26 = vector.broadcast %25 : vector<32x1xf32> to vector<32x256xf32>
    %27 = arith.mulf %24, %26 : vector<32x256xf32>
    %c0_13 = arith.constant 0 : index
    %c0_14 = arith.constant 0 : index
    %28 = vector.load %arg5[%c0_13, %c0_14] : memref<32x1xf32, #tpu.memory_space<vmem>>, vector<32x1xf32>
    %29 = vector.broadcast %28 : vector<32x1xf32> to vector<32x256xf32>
    %30 = arith.addf %27, %29 : vector<32x256xf32>
    %c0_15 = arith.constant 0 : index
    %c0_16 = arith.constant 0 : index
    %c0_17 = arith.constant 0 : index
    %31 = vector.load %arg6[%c0_15, %c0_16, %c0_17] : memref<1x32x256xf32, #tpu.memory_space<vmem>>, vector<1x32x256xf32>
    %32 = vector.shape_cast %31 : vector<1x32x256xf32> to vector<32x256xf32>
    %33 = vector.shape_cast %30 : vector<32x256xf32> to vector<1x32x256xf32>
    tpu.vector_store %arg6[%c0_15, %c0_16, %c0_17], %33 {strides = array<i32>} : memref<1x32x256xf32, #tpu.memory_space<vmem>>, vector<1x32x256xf32>,
    return
  }
  func.func @transform_0(%arg0: i32) -> (i32, i32, i32) {
    %c0_i32 = arith.constant 0 : i32
    %c0_i32_0 = arith.constant 0 : i32
    %c0_i32_1 = arith.constant 0 : i32
    return %arg0, %c0_i32, %c0_i32_0 : i32, i32, i32
  }
  func.func @transform_1(%arg0: i32) -> (i32, i32) {
    %c0_i32 = arith.constant 0 : i32
    %c0_i32_0 = arith.constant 0 : i32
    %c0_i32_1 = arith.constant 0 : i32
    return %c0_i32, %c0_i32_0 : i32, i32
  }
  func.func @transform_2(%arg0: i32) -> (i32, i32) {
    %c0_i32 = arith.constant 0 : i32
    %c0_i32_0 = arith.constant 0 : i32
    %c0_i32_1 = arith.constant 0 : i32
    return %c0_i32, %c0_i32_0 : i32, i32
  }
  func.func @transform_3(%arg0: i32) -> (i32, i32) {
    %c0_i32 = arith.constant 0 : i32
    %c0_i32_0 = arith.constant 0 : i32
    %c0_i32_1 = arith.constant 0 : i32
    return %c0_i32, %c0_i32_0 : i32, i32
  }
  func.func @transform_4(%arg0: i32) -> (i32, i32) {
    %c0_i32 = arith.constant 0 : i32
    %c0_i32_0 = arith.constant 0 : i32
    %c0_i32_1 = arith.constant 0 : i32
    return %c0_i32, %c0_i32_0 : i32, i32
  }
  func.func @transform_5(%arg0: i32) -> (i32, i32, i32) {
    %c0_i32 = arith.constant 0 : i32
    %c0_i32_0 = arith.constant 0 : i32
    %c0_i32_1 = arith.constant 0 : i32
    return %arg0, %c0_i32, %c0_i32_0 : i32, i32, i32
  }
}

</mosaic_0001>

<llo_original>
// kernel: tpu_custom_call.1
$region0: #{tpu_custom_call.1}
  #allocation0 [shape = 'u32[]', space=smem, size = 0x4, offset = 0x4, fixed_abs, tag = 'smem constant byte address 0x4 - core index']
  #allocation1 [shape = 'u32[144,128]{1,0:T(1,128)}', space=vmem, size = 0x12000, scoped, tag = 'internal scratch']
  %s0 = inlined_call_operand.vmem [shape: f32[2,4,256], index: 0, kind: input, shape index: {}]
  %s1 = inlined_call_operand.vmem [shape: f32[32,4], index: 1, kind: input, shape index: {}]
  %s2 = inlined_call_operand.vmem [shape: f32[32,1], index: 2, kind: input, shape index: {}]
  %s3 = inlined_call_operand.vmem [shape: f32[32,1], index: 3, kind: input, shape index: {}]
  %s4 = inlined_call_operand.vmem [shape: f32[32,1], index: 4, kind: input, shape index: {}]
  %s5 = inlined_call_operand.hbm [shape: f32[2,32,256], index: 5, kind: output, shape index: {}]
  %s6 = sld [smem:[#allocation0]]
  $region53: #{tpu_custom_call.1} parent=0
    _
  %s8 = ssub.s32 1, %s6
  %s9 = scalar_select 0, %s8, %s6
  $region1: #{tpu_custom_call.1} parent=0
    #allocation2 [shape = 'u8[65536]{0}', space=vmem, size = 0x10000, scoped, tag = 'output window, operand 0']
    #allocation3 [shape = 's32[2]{0}', space=sflag, size = 0x8, scoped, tag = 'scoped memory for tpu_custom_call.1']
    %10 = vsyncpa [#allocation3], 0
    %s11 = scalar_lea.sflag [#allocation3], 1
    %12 = vsyncpa %s11, 0
    loop: start=0, step=1, limit=4
    $region2: #{tpu_custom_call.1} parent=1 // loop_pre_header
      _
    $region3: #{tpu_custom_call.1} parent=1 // loop_header
      %s14 = sphi 0, %s18
      %p15 = scmp.ge.s32.totalorder %s14, 4
      %s24 = sphi 0, %s26
      %s27 = sphi 0, %s24
      %s28 = sphi 0, %s27
      %s44 = sphi 0, %s28
      %s48 = sphi 0, %s48
      %s50 = sphi 0, %s48
      %s51 = sphi 0, %s50
      %s65 = sphi 0, %s51
      %s69 = sphi 0, %s69
      %s71 = sphi 0, %s69
      %s72 = sphi 0, %s71
      %s86 = sphi 0, %s72
      %s90 = sphi 0, %s90
      %s92 = sphi 0, %s90
      %s93 = sphi 0, %s92
      %s107 = sphi 0, %s93
      %s111 = sphi 0, %s111
      %s113 = sphi 0, %s111
      %s114 = sphi 0, %s113
      %s128 = sphi 0, %s114
      %s134 = sphi 0, %s136
      %s137 = sphi 0, %s134
      %s138 = sphi 0, %s137
      %s154 = sphi 0, %s138
    $region4: #{tpu_custom_call.1} parent=1 // loop_header_branch
      %17 = sbr.rel (%p15) target = $region8
    $region5: #{tpu_custom_call.1} parent=1 // loop_body
      %s19 = ssub.s32 %s14, 1
      %s20 = ssub.s32 %s14, 2
      %s21 = sadd.s32 %s14, 1
      %s22 = ssub.s32 %s14, %s21
      %p23 = scmp.eq.s32.totalorder %s22, 0
      %s25 = sadd.s32 %s24, 1
      %s26 = scalar_select %p23, %s24, %s25
      %p29 = pneg %p23
      %p30 = scmp.eq.s32.totalorder %s14, 1
      %p31 = por %p29, %p30
      %p32 = scmp.ne.s32.totalorder %s24, %s27
      %p33 = scmp.eq.s32.totalorder %s14, 0
      %p34 = por %p32, %p33
      %p35 = scmp.ne.s32.totalorder %s24, %s27
      %p36 = scmp.eq.s32.totalorder %s19, 1
      %p37 = por %p35, %p36
      %p38 = scmp.ne.s32.totalorder %s27, %s28
      %p39 = scmp.eq.s32.totalorder %s19, 0
      %p40 = por %p38, %p39
      %p41 = scmp.ne.s32.totalorder %s27, %s28
      %p42 = scmp.eq.s32.totalorder %s20, 1
      %p43 = por %p41, %p42
      %p45 = scmp.ne.s32.totalorder %s28, %s44
      %p46 = scmp.eq.s32.totalorder %s20, 0
      %p47 = por %p45, %p46
      %s49 = sadd.s32 %s48, 1
      %p52 = scmp.eq.s32.totalorder %s14, 1
      %p53 = scmp.ne.s32.totalorder %s48, %s50
      %p54 = scmp.eq.s32.totalorder %s14, 0
      %p55 = por %p53, %p54
      %p56 = scmp.ne.s32.totalorder %s48, %s50
      %p57 = scmp.eq.s32.totalorder %s19, 1
      %p58 = por %p56, %p57
      %p59 = scmp.ne.s32.totalorder %s50, %s51
      %p60 = scmp.eq.s32.totalorder %s19, 0
      %p61 = por %p59, %p60
      %p62 = scmp.ne.s32.totalorder %s50, %s51
      %p63 = scmp.eq.s32.totalorder %s20, 1
      %p64 = por %p62, %p63
      %p66 = scmp.ne.s32.totalorder %s51, %s65
      %p67 = scmp.eq.s32.totalorder %s20, 0
      %p68 = por %p66, %p67
      %s70 = sadd.s32 %s69, 1
      %p73 = scmp.eq.s32.totalorder %s14, 1
      %p74 = scmp.ne.s32.totalorder %s69, %s71
      %p75 = scmp.eq.s32.totalorder %s14, 0
      %p76 = por %p74, %p75
      %p77 = scmp.ne.s32.totalorder %s69, %s71
      %p78 = scmp.eq.s32.totalorder %s19, 1
      %p79 = por %p77, %p78
      %p80 = scmp.ne.s32.totalorder %s71, %s72
      %p81 = scmp.eq.s32.totalorder %s19, 0
      %p82 = por %p80, %p81
      %p83 = scmp.ne.s32.totalorder %s71, %s72
      %p84 = scmp.eq.s32.totalorder %s20, 1
      %p85 = por %p83, %p84
      %p87 = scmp.ne.s32.totalorder %s72, %s86
      %p88 = scmp.eq.s32.totalorder %s20, 0
      %p89 = por %p87, %p88
      %s91 = sadd.s32 %s90, 1
      %p94 = scmp.eq.s32.totalorder %s14, 1
      %p95 = scmp.ne.s32.totalorder %s90, %s92
      %p96 = scmp.eq.s32.totalorder %s14, 0
      %p97 = por %p95, %p96
      %p98 = scmp.ne.s32.totalorder %s90, %s92
      %p99 = scmp.eq.s32.totalorder %s19, 1
      %p100 = por %p98, %p99
      %p101 = scmp.ne.s32.totalorder %s92, %s93
      %p102 = scmp.eq.s32.totalorder %s19, 0
      %p103 = por %p101, %p102
      %p104 = scmp.ne.s32.totalorder %s92, %s93
      %p105 = scmp.eq.s32.totalorder %s20, 1
      %p106 = por %p104, %p105
      %p108 = scmp.ne.s32.totalorder %s93, %s107
      %p109 = scmp.eq.s32.totalorder %s20, 0
      %p110 = por %p108, %p109
      %s112 = sadd.s32 %s111, 1
      %p115 = scmp.eq.s32.totalorder %s14, 1
      %p116 = scmp.ne.s32.totalorder %s111, %s113
      %p117 = scmp.eq.s32.totalorder %s14, 0
      %p118 = por %p116, %p117
      %p119 = scmp.ne.s32.totalorder %s111, %s113
      %p120 = scmp.eq.s32.totalorder %s19, 1
      %p121 = por %p119, %p120
      %p122 = scmp.ne.s32.totalorder %s113, %s114
      %p123 = scmp.eq.s32.totalorder %s19, 0
      %p124 = por %p122, %p123
      %p125 = scmp.ne.s32.totalorder %s113, %s114
      %p126 = scmp.eq.s32.totalorder %s20, 1
      %p127 = por %p125, %p126
      %p129 = scmp.ne.s32.totalorder %s114, %s128
      %p130 = scmp.eq.s32.totalorder %s20, 0
      %p131 = por %p129, %p130
      %s132 = ssub.s32 %s14, %s21
      %p133 = scmp.eq.s32.totalorder %s132, 0
      %s135 = sadd.s32 %s134, 1
      %s136 = scalar_select %p133, %s134, %s135
      %p139 = pneg %p133
      %p140 = scmp.eq.s32.totalorder %s14, 1
      %p141 = por %p139, %p140
      %p142 = scmp.ne.s32.totalorder %s134, %s137
      %p143 = scmp.eq.s32.totalorder %s14, 0
      %p144 = por %p142, %p143
      %p145 = scmp.ne.s32.totalorder %s134, %s137
      %p146 = scmp.eq.s32.totalorder %s19, 1
      %p147 = por %p145, %p146
      %p148 = scmp.ne.s32.totalorder %s137, %s138
      %p149 = scmp.eq.s32.totalorder %s19, 0
      %p150 = por %p148, %p149
      %p151 = scmp.ne.s32.totalorder %s137, %s138
      %p152 = scmp.eq.s32.totalorder %s20, 1
      %p153 = por %p151, %p152
      %p155 = scmp.ne.s32.totalorder %s138, %s154
      %p156 = scmp.eq.s32.totalorder %s20, 0
      %p157 = por %p155, %p156
      %p158 = scmp.le.s32.totalorder 1, %s14
      %p159 = scmp.lt.s32.totalorder %s14, 3
      %p160 = pnand %p158, %p159
      %p161 = pneg %p160
      // Predicated region
      $region9: #{tpu_custom_call.1} parent=5 // pred_check
        _
      $region10: #{tpu_custom_call.1} parent=5 // pred_check_branch
        %163 = sbr.rel (%p160) target = $region12
      $region11: #{tpu_custom_call.1} parent=5 // pred_region
        %s164 = ssub.s32 %s14, 1
        // Predicated region
        $region13: #{tpu_custom_call.1} parent=11 // pred_check
          %p165 = pneg %p61
        $region14: #{tpu_custom_call.1} parent=11 // pred_check_branch
          %167 = sbr.rel (%p165) target = $region16
        $region15: #{tpu_custom_call.1} parent=11 // pred_region
          _
        $region16: #{tpu_custom_call.1} parent=11 // pred_fallthru
          _
        // Predicated region
        $region17: #{tpu_custom_call.1} parent=11 // pred_check
          %p168 = pneg %p82
        $region18: #{tpu_custom_call.1} parent=11 // pred_check_branch
          %170 = sbr.rel (%p168) target = $region20
        $region19: #{tpu_custom_call.1} parent=11 // pred_region
          _
        $region20: #{tpu_custom_call.1} parent=11 // pred_fallthru
          _
        // Predicated region
        $region21: #{tpu_custom_call.1} parent=11 // pred_check
          %p171 = pneg %p103
        $region22: #{tpu_custom_call.1} parent=11 // pred_check_branch
          %173 = sbr.rel (%p171) target = $region24
        $region23: #{tpu_custom_call.1} parent=11 // pred_region
          _
        $region24: #{tpu_custom_call.1} parent=11 // pred_fallthru
          _
        // Predicated region
        $region25: #{tpu_custom_call.1} parent=11 // pred_check
          %p174 = pneg %p124
        $region26: #{tpu_custom_call.1} parent=11 // pred_check_branch
          %176 = sbr.rel (%p174) target = $region28
        $region27: #{tpu_custom_call.1} parent=11 // pred_region
          _
        $region28: #{tpu_custom_call.1} parent=11 // pred_fallthru
          _
      $region12: #{tpu_custom_call.1} parent=5 // pred_fallthru
        _
      %p177 = scmp.lt.s32.totalorder %s14, 2
      // Predicated region
      $region29: #{tpu_custom_call.1} parent=5 // pred_check
        %p178 = pneg %p177
      $region30: #{tpu_custom_call.1} parent=5 // pred_check_branch
        %180 = sbr.rel (%p178) target = $region32
      $region31: #{tpu_custom_call.1} parent=5 // pred_region
        // Predicated region
        $region33: #{tpu_custom_call.1} parent=31 // pred_check
          %p181 = pneg %p34
        $region34: #{tpu_custom_call.1} parent=31 // pred_check_branch
          %183 = sbr.rel (%p181) target = $region36
        $region35: #{tpu_custom_call.1} parent=31 // pred_region
          %p184 = scmp.lt.s32.totalorder %s14, 1
          %s185 = scalar_select %p184, %s14, 1
          %s186 = smul.addr %s185, 2
          %s187 = smul.addr %s186, 4
          %s188 = scalar_lea.vmem %s0, %s187
        $region36: #{tpu_custom_call.1} parent=31 // pred_fallthru
          _
      $region32: #{tpu_custom_call.1} parent=5 // pred_fallthru
        _
      %p189 = scmp.le.s32.totalorder 1, %s14
      %p190 = scmp.lt.s32.totalorder %s14, 3
      %p191 = pnand %p189, %p190
      %p192 = pneg %p191
      // Predicated region
      $region37: #{tpu_custom_call.1} parent=5 // pred_check
        _
      $region38: #{tpu_custom_call.1} parent=5 // pred_check_branch
        %194 = sbr.rel (%p191) target = $region40
      $region39: #{tpu_custom_call.1} parent=5 // pred_region
        %s195 = ssub.s32 %s14, 1
        %p196 = scmp.lt.s32.totalorder %s19, 1
        %s197 = scalar_select %p196, %s19, 1
        %s198 = smul.addr %s197, 2
        %s199 = smul.addr %s198, 4
        %s200 = scalar_lea.vmem %s0, %s199
        %p201 = pneg %p40
        %p202 = pneg %p37
        %p203 = pneg %p61
        %p204 = pneg %p58
        %p205 = pneg %p82
        %p206 = pneg %p79
        %p207 = pneg %p103
        %p208 = pneg %p100
        %p209 = pneg %p124
        %p210 = pneg %p121
        %p211 = pneg %p150
        %p212 = pneg %p147
        %s213 = sand.u32 %s137, 1
        %s214 = scalar_lea.sflag [#allocation3], %s213
        %s215 = sand.u32 %s137, 1
        %s216 = smul.addr %s215, 64
        %s217 = scalar_lea.vmem [#allocation2], %s216
        %p218 = scmp.lt.s32.totalorder %s19, 1
        %s219 = scalar_select %p218, %s19, 1
        %s220 = smul.addr %s219, 2
        %s221 = smul.addr %s220, 4
        %s222 = scalar_lea.vmem %s0, %s221
        %v223 = vld [vmem:[%s222] sm:$0xff]
        %v224 = vld [vmem:[%s1] sm:$0xff]
        %v225 = vld [vmem:[%s1 + $0x8] sm:$0xff]
        %v226 = vld [vmem:[%s1 + $0x10] sm:$0xff]
        %v227 = vld [vmem:[%s1 + $0x18] sm:$0xff]
        %v228 = vld [vmem:[%s2] sm:$0xff]
        %v229 = vld [vmem:[%s2 + $0x8] sm:$0xff]
        %v230 = vld [vmem:[%s2 + $0x10] sm:$0xff]
        %v231 = vld [vmem:[%s2 + $0x18] sm:$0xff]
        %233 = vset.pattern.permute.xlu0 0
        %234 = vperm.xlu0 %233, %v228
        %v235 = vpop.permute.xlu0 %234
        %238 = vset.pattern.permute.xlu0 0
        %239 = vperm.xlu0 %238, %v229
        %v240 = vpop.permute.xlu0 %239
        %243 = vset.pattern.permute.xlu0 0
        %244 = vperm.xlu0 %243, %v230
        %v245 = vpop.permute.xlu0 %244
        %248 = vset.pattern.permute.xlu0 0
        %249 = vperm.xlu0 %248, %v231
        %v250 = vpop.permute.xlu0 %249
        %v253 = vcombine.high %v223, %v223
        %vm254 = vcmask 31744
        %v256 = vsel %vm254, %v224, 0
        %v259 = vsel %vm254, %v225, 0
        %v262 = vsel %vm254, %v226, 0
        %v265 = vsel %vm254, %v227, 0
        %vm267 = vcmask 1043456
        %v268 = vsel %vm267, %v223, 0
        %v270 = vsel %vm267, %v253, 0
        %272 = vmatprep.subr.mxu0 0.0
        %273 = vmatpush1.msra.mxu0 0.0
        %274 = vmatprep.subr.mxu0 0.0
        %275 = vmatpush1.msra.mxu0 0.0
        %276 = vmatprep.subr.mxu0 0.0
        %277 = vmatpush1.msra.mxu0 0.0
        %278 = vmatprep.subr.mxu0 0.0
        %279 = vmatpush1.msra.mxu0 0.0
        %280 = vmatprep.subr.mxu0 0.0
        %281 = vmatpush1.msra.mxu0 0.0
        %282 = vmatprep.subr.mxu0 0.0
        %283 = vmatpush1.msra.mxu0 0.0
        %284 = vmatprep.subr.mxu0 0.0
        %285 = vmatpush1.msra.mxu0 0.0
        %286 = vmatprep.subr.mxu0 0.0
        %287 = vmatpush1.msra.mxu0 0.0
        %288 = vmatprep.subr.mxu0 0.0
        %289 = vmatpush1.msra.mxu0 0.0
        %290 = vmatprep.subr.mxu0 0.0
        %291 = vmatpush1.msra.mxu0 0.0
        %292 = vmatprep.subr.mxu0 0.0
        %293 = vmatpush1.msra.mxu0 0.0
        %294 = vmatprep.subr.mxu0 0.0
        %295 = vmatpush1.msra.mxu0 0.0
        %296 = vmatprep.subr.mxu0 0.0
        %297 = vmatpush1.msra.mxu0 0.0
        %298 = vmatprep.subr.mxu0 0.0
        %299 = vmatpush1.msra.mxu0 0.0
        %300 = vmatprep.subr.mxu0 0.0
        %301 = vmatpush1.msra.mxu0 0.0
        %302 = vmatprep.subr.mxu0 %v270
        %303 = vmatpush1.msra.mxu0 %v268
        %304 = vmatprep.subr.mxu0 0.0
        %305 = vmatpush2.msra.mxu0 0.0
        %306 = vmatprep.subr.mxu0 0.0
        %307 = vmatpush2.msra.mxu0 0.0
        %308 = vmatprep.subr.mxu0 0.0
        %309 = vmatpush2.msra.mxu0 0.0
        %310 = vmatprep.subr.mxu0 0.0
        %311 = vmatpush2.msra.mxu0 0.0
        %312 = vmatprep.subr.mxu0 0.0
        %313 = vmatpush2.msra.mxu0 0.0
        %314 = vmatprep.subr.mxu0 0.0
        %315 = vmatpush2.msra.mxu0 0.0
        %316 = vmatprep.subr.mxu0 0.0
        %317 = vmatpush2.msra.mxu0 0.0
        %318 = vmatprep.subr.mxu0 0.0
        %319 = vmatpush2.msra.mxu0 0.0
        %320 = vmatprep.subr.mxu0 0.0
        %321 = vmatpush2.msra.mxu0 0.0
        %322 = vmatprep.subr.mxu0 0.0
        %323 = vmatpush2.msra.mxu0 0.0
        %324 = vmatprep.subr.mxu0 0.0
        %325 = vmatpush2.msra.mxu0 0.0
        %326 = vmatprep.subr.mxu0 0.0
        %327 = vmatpush2.msra.mxu0 0.0
        %328 = vmatprep.subr.mxu0 0.0
        %329 = vmatpush2.msra.mxu0 0.0
        %330 = vmatprep.subr.mxu0 0.0
        %331 = vmatpush2.msra.mxu0 0.0
        %332 = vmatprep.subr.mxu0 0.0
        %333 = vmatpush2.msra.mxu0 0.0
        %334 = vmatprep.subr.mxu0 0.0
        %335 = vmatpush2.msra.mxu0 0.0
        %336 = vmatprep.mubr.f32.mxu0 0.0
        %337 = vmatmul.mubr.f32.gmra.mxu0 %v256
        %v338 = vpop.f32.mrf.mxu0
        %v339 = vadd.f32 %v235, %v338
        %v340 = vpop.f32.mrf.mxu0
        %v341 = vadd.f32 %v235, %v340
        %342 = vmatprep.mubr.f32.mxu0 0.0
        %343 = vmatmul.mubr.f32.gmra.mxu0 %v259
        %v344 = vpop.f32.mrf.mxu0
        %v345 = vadd.f32 %v240, %v344
        %v346 = vpop.f32.mrf.mxu0
        %v347 = vadd.f32 %v240, %v346
        %348 = vmatprep.mubr.f32.mxu0 0.0
        %349 = vmatmul.mubr.f32.gmra.mxu0 %v262
        %v350 = vpop.f32.mrf.mxu0
        %v351 = vadd.f32 %v245, %v350
        %v352 = vpop.f32.mrf.mxu0
        %v353 = vadd.f32 %v245, %v352
        %354 = vmatprep.mubr.f32.mxu0 0.0
        %355 = vmatmul.mubr.f32.gmra.mxu0 %v265
        %v356 = vpop.f32.mrf.mxu0
        %v357 = vadd.f32 %v250, %v356
        %v358 = vpop.f32.mrf.mxu0
        %v359 = vadd.f32 %v250, %v358
        %360 = vdwg.mxu0
        %v361 = vadd.f32 %v339, %v341
        %362 = vadd.xlane.f32.xlu0 %v361
        %v363 = vpop.xlane.xlu0 %362
        %v364 = vadd.f32 %v345, %v347
        %365 = vadd.xlane.f32.xlu0 %v364
        %v366 = vpop.xlane.xlu0 %365
        %v367 = vadd.f32 %v351, %v353
        %368 = vadd.xlane.f32.xlu0 %v367
        %v369 = vpop.xlane.xlu0 %368
        %v370 = vadd.f32 %v357, %v359
        %371 = vadd.xlane.f32.xlu0 %v370
        %v372 = vpop.xlane.xlu0 %371
        %v373 = vrcp.pop 256.0
        %v374 = vmul.f32 %v363, %v373
        %v375 = vmul.f32 %v366, %v373
        %v376 = vmul.f32 %v369, %v373
        %v377 = vmul.f32 %v372, %v373
        %v378 = vsub.f32 %v339, %v374
        %v379 = vsub.f32 %v341, %v374
        %v380 = vsub.f32 %v345, %v375
        %v381 = vsub.f32 %v347, %v375
        %v382 = vsub.f32 %v351, %v376
        %v383 = vsub.f32 %v353, %v376
        %v384 = vsub.f32 %v357, %v377
        %v385 = vsub.f32 %v359, %v377
        %v386 = vmul.f32 %v378, %v378
        %v387 = vmul.f32 %v379, %v379
        %v388 = vmul.f32 %v380, %v380
        %v389 = vmul.f32 %v381, %v381
        %v390 = vmul.f32 %v382, %v382
        %v391 = vmul.f32 %v383, %v383
        %v392 = vmul.f32 %v384, %v384
        %v393 = vmul.f32 %v385, %v385
        %v394 = vadd.f32 %v386, %v387
        %395 = vadd.xlane.f32.xlu0 %v394
        %v396 = vpop.xlane.xlu0 %395
        %v397 = vadd.f32 %v388, %v389
        %398 = vadd.xlane.f32.xlu0 %v397
        %v399 = vpop.xlane.xlu0 %398
        %v400 = vadd.f32 %v390, %v391
        %401 = vadd.xlane.f32.xlu0 %v400
        %v402 = vpop.xlane.xlu0 %401
        %v403 = vadd.f32 %v392, %v393
        %404 = vadd.xlane.f32.xlu0 %v403
        %v405 = vpop.xlane.xlu0 %404
        %v406 = vmul.f32 %v396, %v373
        %v407 = vmul.f32 %v399, %v373
        %v408 = vmul.f32 %v402, %v373
        %v409 = vmul.f32 %v405, %v373
        %v410 = vadd.f32 %v406, 1e-05
        %v411 = vadd.f32 %v407, 1e-05
        %v412 = vadd.f32 %v408, 1e-05
        %v413 = vadd.f32 %v409, 1e-05
        %v414 = vrsqrt.pop %v410
        %v415 = vrsqrt.pop %v411
        %v416 = vrsqrt.pop %v412
        %v417 = vrsqrt.pop %v413
        %v418 = vmul.f32 %v378, %v414
        %v419 = vmul.f32 %v379, %v414
        %v420 = vmul.f32 %v380, %v415
        %v421 = vmul.f32 %v381, %v415
        %v422 = vmul.f32 %v382, %v416
        %v423 = vmul.f32 %v383, %v416
        %v424 = vmul.f32 %v384, %v417
        %v425 = vmul.f32 %v385, %v417
        %v426 = vld [vmem:[%s3] sm:$0xff]
        %v427 = vld [vmem:[%s3 + $0x8] sm:$0xff]
        %v428 = vld [vmem:[%s3 + $0x10] sm:$0xff]
        %v429 = vld [vmem:[%s3 + $0x18] sm:$0xff]
        %431 = vset.pattern.permute.xlu0 0
        %432 = vperm.xlu0 %431, %v426
        %v433 = vpop.permute.xlu0 %432
        %436 = vset.pattern.permute.xlu0 0
        %437 = vperm.xlu0 %436, %v427
        %v438 = vpop.permute.xlu0 %437
        %441 = vset.pattern.permute.xlu0 0
        %442 = vperm.xlu0 %441, %v428
        %v443 = vpop.permute.xlu0 %442
        %446 = vset.pattern.permute.xlu0 0
        %447 = vperm.xlu0 %446, %v429
        %v448 = vpop.permute.xlu0 %447
        %v450 = vmul.f32 %v418, %v433
        %v451 = vmul.f32 %v419, %v433
        %v452 = vmul.f32 %v420, %v438
        %v453 = vmul.f32 %v421, %v438
        %v454 = vmul.f32 %v422, %v443
        %v455 = vmul.f32 %v423, %v443
        %v456 = vmul.f32 %v424, %v448
        %v457 = vmul.f32 %v425, %v448
        %v458 = vld [vmem:[%s4] sm:$0xff]
        %v459 = vld [vmem:[%s4 + $0x8] sm:$0xff]
        %v460 = vld [vmem:[%s4 + $0x10] sm:$0xff]
        %v461 = vld [vmem:[%s4 + $0x18] sm:$0xff]
        %463 = vset.pattern.permute.xlu0 0
        %464 = vperm.xlu0 %463, %v458
        %v465 = vpop.permute.xlu0 %464
        %468 = vset.pattern.permute.xlu0 0
        %469 = vperm.xlu0 %468, %v459
        %v470 = vpop.permute.xlu0 %469
        %473 = vset.pattern.permute.xlu0 0
        %474 = vperm.xlu0 %473, %v460
        %v475 = vpop.permute.xlu0 %474
        %478 = vset.pattern.permute.xlu0 0
        %479 = vperm.xlu0 %478, %v461
        %v480 = vpop.permute.xlu0 %479
        %v482 = vadd.f32 %v450, %v465
        %v483 = vadd.f32 %v451, %v465
        %v484 = vadd.f32 %v452, %v470
        %v485 = vadd.f32 %v453, %v470
        %v486 = vadd.f32 %v454, %v475
        %v487 = vadd.f32 %v455, %v475
        %v488 = vadd.f32 %v456, %v480
        %v489 = vadd.f32 %v457, %v480
        %490 = vst [vmem:[%s217] sm:$0xff] %v482
        %491 = vst [vmem:[%s217 + $0x8] sm:$0xff] %v483
        %492 = vst [vmem:[%s217 + $0x10] sm:$0xff] %v484
        %493 = vst [vmem:[%s217 + $0x18] sm:$0xff] %v485
        %494 = vst [vmem:[%s217 + $0x20] sm:$0xff] %v486
        %495 = vst [vmem:[%s217 + $0x28] sm:$0xff] %v487
        %496 = vst [vmem:[%s217 + $0x30] sm:$0xff] %v488
        %497 = vst [vmem:[%s217 + $0x38] sm:$0xff] %v489
        %s498 = sand.u32 %s137, 1
        %s499 = scalar_lea.sflag [#allocation3], %s498
        %s500 = sand.u32 %s137, 1
        %s501 = smul.addr %s500, 64
        %s502 = scalar_lea.vmem [#allocation2], %s501
        // Predicated region
        $region41: #{tpu_custom_call.1} parent=39 // pred_check
          %p503 = pneg %p147
        $region42: #{tpu_custom_call.1} parent=39 // pred_check_branch
          %505 = sbr.rel (%p503) target = $region44
        $region43: #{tpu_custom_call.1} parent=39 // pred_region
          %s507 = ssub.s32 1024, 1024
          %508 = vsyncadd %s499, %s507
          %s509 = smul.addr %s19, 8
          %s510 = smul.addr %s509, 128
          %s511 = scalar_lea.hbm %s5, %s510
          %s512 = sshll.u32 %s502, 4
          %s513 = int_to_ptr.vmem [resolvable:$true] %s512
          %518 = dma.vmem_to_hbm [thread:$0]  %s513, 1024, %s511, %s499, 256, 256, 16
        $region44: #{tpu_custom_call.1} parent=39 // pred_fallthru
          _
      $region40: #{tpu_custom_call.1} parent=5 // pred_fallthru
        _
      %p519 = scmp.le.s32.totalorder 2, %s14
      // Predicated region
      $region45: #{tpu_custom_call.1} parent=5 // pred_check
        %p520 = pneg %p519
      $region46: #{tpu_custom_call.1} parent=5 // pred_check_branch
        %522 = sbr.rel (%p520) target = $region48
      $region47: #{tpu_custom_call.1} parent=5 // pred_region
        %s523 = ssub.s32 %s14, 2
        // Predicated region
        $region49: #{tpu_custom_call.1} parent=47 // pred_check
          %p524 = pneg %p153
        $region50: #{tpu_custom_call.1} parent=47 // pred_check_branch
          %526 = sbr.rel (%p524) target = $region52
        $region51: #{tpu_custom_call.1} parent=47 // pred_region
          %s527 = sand.u32 %s138, 1
          %s528 = scalar_lea.sflag [#allocation3], %s527
          %s529 = sand.u32 %s138, 1
          %s530 = smul.addr %s529, 64
          %s531 = scalar_lea.vmem [#allocation2], %s530
          %532 = dma.done %s528, 1024
        $region52: #{tpu_custom_call.1} parent=47 // pred_fallthru
          _
      $region48: #{tpu_custom_call.1} parent=5 // pred_fallthru
        _
    $region6: #{tpu_custom_call.1} parent=1 // loop_footer
      %s18 = sadd.s32 1, %s14
    $region7: #{tpu_custom_call.1} parent=1 // loop_footer_branch
      %13 = sbr.rel target = $region3
    $region8: #{tpu_custom_call.1} parent=1 // loop_exit
      _
    %533 = vsyncpa [#allocation3], 1
    %s534 = scalar_lea.sflag [#allocation3], 1
    %535 = vsyncpa %s534, 1

</llo_original>
